<compile_context>
chip_gen: v5e
topology: v5e:2x2
jax: 0.10.0
libtpu: 0.0.40
codegen_flags: <defaults>
</compile_context>

<pallas_src>
import functools

import jax
import jax.numpy as jnp
from jax.experimental import pallas as pl
from jax.experimental.pallas import tpu as pltpu

OBS_DIM = 4              # CartPole-v1 observation_space.shape[0]
ACT_DIM = 2              # CartPole-v1 action_space.n
HIDDEN = 64
HEAD_DIM = ACT_DIM + 1   # fused actor (2) + critic (1) head
B_TILE_MAX = 4096        # single grid step up to this many rows (~1.2 MiB VMEM)


def actor_critic_kernel(obs_ref, w1_ref, w2_ref, wh_ref, bias_ref, out_ref):
    # Everything is feature-major (transposed) so the batch sits on lanes.
    x = obs_ref[...]                                   # (OBS_DIM, Bt)
    b = bias_ref[...]                                  # (HIDDEN, 3): [b1 | b2 | bh(pad)]
    h1 = jnp.tanh(
        jnp.dot(w1_ref[...], x, preferred_element_type=jnp.float32) + b[:, 0:1]
    )                                                  # (HIDDEN, Bt)
    h2 = jnp.tanh(
        jnp.dot(w2_ref[...], h1, preferred_element_type=jnp.float32) + b[:, 1:2]
    )                                                  # (HIDDEN, Bt)
    # Fused actor/critic head: one MXU push, one lane-dense store.
    out_ref[...] = (
        jnp.dot(wh_ref[...], h2, preferred_element_type=jnp.float32)
        + b[:HEAD_DIM, 2:3]
    )                                                  # (HEAD_DIM, Bt)
    # TODO(synk): for the rollout path, fuse log-softmax + Gumbel-max sampling
    # (pltpu.prng_seed / pltpu.prng_random_bits) so act() returns
    # (action, log_prob, entropy, value) from a single launch.


def pack_params(params):
    """One-time repack into the kernel's transposed, fused layout."""
    w1t = params["w1"].T                                             # (HIDDEN, OBS_DIM)
    w2t = params["w2"].T                                             # (HIDDEN, HIDDEN)
    wht = jnp.concatenate([params["wa"], params["wc"]], axis=1).T    # (HEAD_DIM, HIDDEN)
    bh = jnp.concatenate([params["ba"], params["bc"]], axis=1)[0]    # (HEAD_DIM,)
    bias = jnp.zeros((HIDDEN, 3), jnp.float32)
    bias = bias.at[:, 0].set(params["b1"][0])
    bias = bias.at[:, 1].set(params["b2"][0])
    bias = bias.at[:HEAD_DIM, 2].set(bh)
    return dict(w1t=w1t, w2t=w2t, wht=wht, bias=bias)


def _ceil_div(a, b):
    return -(-a // b)


def _choose_tile(B, b_tile_max):
    """Batch-tile selection (trace-time Python ints).

    Single grid step whenever the batch fits (block == full dim, so no
    (8,128) divisibility requirement and no padding).  Otherwise pick a
    lane-aligned tile targeting an even step count for v7x megacore.
    """
    if B <= b_tile_max:
        return B, 1
    n_pairs = _ceil_div(B, 2 * b_tile_max)
    per_step = _ceil_div(B, 2 * n_pairs)
    tile = _ceil_div(per_step, 128) * 128            # lane-aligned tile
    n_steps = _ceil_div(B, tile)                     # last block may be partial
    return tile, n_steps


@functools.partial(jax.jit, static_argnames=("b_tile_max",))
def actor_critic_forward(obs, packed, b_tile_max=B_TILE_MAX):
    """obs: (B, OBS_DIM) float32. Returns (logits (B, ACT_DIM), value (B, 1))."""
    B = obs.shape[0]
    obs_t = obs.T                                     # (OBS_DIM, B) lane-dense plumbing
    tile, n_steps = _choose_tile(B, b_tile_max)

    resident = lambda i: (0, 0)                       # weights stay VMEM-resident
    out_t = pl.pallas_call(
        actor_critic_kernel,
        out_shape=jax.ShapeDtypeStruct((HEAD_DIM, B), jnp.float32),
        grid=(n_steps,),
        in_specs=[
            pl.BlockSpec((OBS_DIM, tile), lambda i: (0, i)),   # obs tile (lane-dense)
            pl.BlockSpec((HIDDEN, OBS_DIM), resident),         # w1^T
            pl.BlockSpec((HIDDEN, HIDDEN), resident),          # w2^T
            pl.BlockSpec((HEAD_DIM, HIDDEN), resident),        # fused head W^T
            pl.BlockSpec((HIDDEN, 3), resident),               # packed biases
        ],
        out_specs=pl.BlockSpec((HEAD_DIM, tile), lambda i: (0, i)),
        compiler_params=pltpu.CompilerParams(
            dimension_semantics=("parallel",)),
    )(obs_t, packed["w1t"], packed["w2t"], packed["wht"], packed["bias"])

    logits = out_t[:ACT_DIM, :].T                     # (B, ACT_DIM)
    value = out_t[ACT_DIM:, :].T                      # (B, 1)
    return logits, value


def init_params(key):
    """Deterministic init mimicking torch.nn.Linear (uniform(-1/sqrt(in), 1/sqrt(in)))."""
    keys = jax.random.split(key, 8)

    def linear_init(kw, kb, fan_in, fan_out):
        bound = 1.0 / jnp.sqrt(fan_in)
        w = jax.random.uniform(kw, (fan_in, fan_out), jnp.float32, -bound, bound)
        b = jax.random.uniform(kb, (1, fan_out), jnp.float32, -bound, bound)
        return w, b

    w1, b1 = linear_init(keys[0], keys[1], OBS_DIM, HIDDEN)
    w2, b2 = linear_init(keys[2], keys[3], HIDDEN, HIDDEN)
    wa, ba = linear_init(keys[4], keys[5], HIDDEN, ACT_DIM)
    wc, bc = linear_init(keys[6], keys[7], HIDDEN, 1)
    return dict(w1=w1, b1=b1, w2=w2, b2=b2, wa=wa, ba=ba, wc=wc, bc=bc)


def reference_forward(obs, p):
    h1 = jnp.tanh(obs @ p["w1"] + p["b1"])
    h2 = jnp.tanh(h1 @ p["w2"] + p["b2"])
    return h2 @ p["wa"] + p["ba"], h2 @ p["wc"] + p["bc"]


def _check(obs, params, packed, **kwargs):
    logits, value = actor_critic_forward(obs, packed, **kwargs)
    jax.block_until_ready((logits, value))
    ref_logits, ref_value = reference_forward(obs, params)
    B = obs.shape[0]
    assert logits.shape == (B, ACT_DIM) and value.shape == (B, 1)
    assert jnp.allclose(logits, ref_logits, atol=1e-5, rtol=1e-5)
    assert jnp.allclose(value, ref_value, atol=1e-5, rtol=1e-5)


if __name__ == "__main__":
    key = jax.random.PRNGKey(0)
    pkey, okey1, okey2 = jax.random.split(key, 3)
    params = init_params(pkey)
    packed = pack_params(params)

    # Small batch (typical act() call during rollout) -> single grid step.
    obs_small = jax.random.normal(okey1, (8, OBS_DIM), dtype=jnp.float32)
    _check(obs_small, params, packed)

    # PPO-scale batch (non-multiple of 128) -> still a single grid step, no padding.
    obs_big = jax.random.normal(okey2, (260, OBS_DIM), dtype=jnp.float32)
    _check(obs_big, params, packed)

    # Force the multi-step grid + partial-final-block masking path.
    _check(obs_big, params, packed, b_tile_max=128)

    print("KERNEL_OK")
</pallas_src>

<mosaic_0001>
module attributes {stable_mosaic.version = 11 : i64} {
  func.func @actor_critic_kernel(%arg0: i32, %arg1: memref<4x8xf32, #tpu.memory_space<vmem>>, %arg2: memref<64x4xf32, #tpu.memory_space<vmem>>, %arg3: memref<64x64xf32, #tpu.memory_space<vmem>>, %arg4: memref<3x64xf32, #tpu.memory_space<vmem>>, %arg5: memref<64x3xf32, #tpu.memory_space<vmem>>, %arg6: memref<3x8xf32, #tpu.memory_space<vmem>>) attributes {dimension_semantics = [#tpu.dimension_semantics<parallel>], iteration_bounds = array<i64: 1>, scalar_prefetch = 0 : i64, scratch_operands = 0 : i64, tpu.core_type = #tpu.core_type<tc>, window_params = [{transform_indices = @transform_0, window_bounds = array<i64: 4, 8>}, {pipeline_mode = #tpu.pipeline_mode<synchronous>, transform_indices = @transform_1, window_bounds = array<i64: 64, 4>}, {pipeline_mode = #tpu.pipeline_mode<synchronous>, transform_indices = @transform_2, window_bounds = array<i64: 64, 64>}, {pipeline_mode = #tpu.pipeline_mode<synchronous>, transform_indices = @transform_3, window_bounds = array<i64: 3, 64>}, {pipeline_mode = #tpu.pipeline_mode<synchronous>, transform_indices = @transform_4, window_bounds = array<i64: 64, 3>}, {transform_indices = @transform_5, window_bounds = array<i64: 3, 8>}]} {
    %c0 = arith.constant 0 : index
    %c0_0 = arith.constant 0 : index
    %0 = vector.load %arg1[%c0, %c0_0] : memref<4x8xf32, #tpu.memory_space<vmem>>, vector<4x8xf32>
    %c0_1 = arith.constant 0 : index
    %c0_2 = arith.constant 0 : index
    %1 = vector.load %arg5[%c0_1, %c0_2] : memref<64x3xf32, #tpu.memory_space<vmem>>, vector<64x3xf32>
    %c0_3 = arith.constant 0 : index
    %c0_4 = arith.constant 0 : index
    %2 = vector.load %arg2[%c0_3, %c0_4] : memref<64x4xf32, #tpu.memory_space<vmem>>, vector<64x4xf32>
    %cst = arith.constant dense<0.000000e+00> : vector<64x8xf32>
    %3 = tpu.matmul %2, %0, %cst {dimension_numbers = #tpu.dot_dimension_numbers<[1], [0], [0], [1], [0, 0, 1, 1], [], []>} : vector<64x4xf32>, vector<4x8xf32>, vector<64x8xf32> -> vector<64x8xf32>
    %4 = vector.extract_strided_slice %1 {offsets = [0, 0], sizes = [64, 1], strides = [1, 1]} : vector<64x3xf32> to vector<64x1xf32>
    %5 = vector.broadcast %4 : vector<64x1xf32> to vector<64x8xf32>
    %6 = arith.addf %3, %5 : vector<64x8xf32>
    %7 = math.tanh %6 : vector<64x8xf32>
    %c0_5 = arith.constant 0 : index
    %c0_6 = arith.constant 0 : index
    %8 = vector.load %arg3[%c0_5, %c0_6] : memref<64x64xf32, #tpu.memory_space<vmem>>, vector<64x64xf32>
    %cst_7 = arith.constant dense<0.000000e+00> : vector<64x8xf32>
    %9 = tpu.matmul %8, %7, %cst_7 {dimension_numbers = #tpu.dot_dimension_numbers<[1], [0], [0], [1], [0, 0, 1, 1], [], []>} : vector<64x64xf32>, vector<64x8xf32>, vector<64x8xf32> -> vector<64x8xf32>
    %10 = vector.extract_strided_slice %1 {offsets = [0, 1], sizes = [64, 1], strides = [1, 1]} : vector<64x3xf32> to vector<64x1xf32>
    %11 = vector.broadcast %10 : vector<64x1xf32> to vector<64x8xf32>
    %12 = arith.addf %9, %11 : vector<64x8xf32>
    %13 = math.tanh %12 : vector<64x8xf32>
    %c0_8 = arith.constant 0 : index
    %c0_9 = arith.constant 0 : index
    %14 = vector.load %arg4[%c0_8, %c0_9] : memref<3x64xf32, #tpu.memory_space<vmem>>, vector<3x64xf32>
    %cst_10 = arith.constant dense<0.000000e+00> : vector<3x8xf32>
    %15 = tpu.matmul %14, %13, %cst_10 {dimension_numbers = #tpu.dot_dimension_numbers<[1], [0], [0], [1], [0, 0, 1, 1], [], []>} : vector<3x64xf32>, vector<64x8xf32>, vector<3x8xf32> -> vector<3x8xf32>
    %16 = vector.extract_strided_slice %1 {offsets = [0, 2], sizes = [3, 1], strides = [1, 1]} : vector<64x3xf32> to vector<3x1xf32>
    %17 = vector.broadcast %16 : vector<3x1xf32> to vector<3x8xf32>
    %18 = arith.addf %15, %17 : vector<3x8xf32>
    %c0_11 = arith.constant 0 : index
    %c0_12 = arith.constant 0 : index
    %19 = vector.load %arg6[%c0_11, %c0_12] : memref<3x8xf32, #tpu.memory_space<vmem>>, vector<3x8xf32>
    tpu.vector_store %arg6[%c0_11, %c0_12], %18 {strides = array<i32>} : memref<3x8xf32, #tpu.memory_space<vmem>>, vector<3x8xf32>,
    return
  }
  func.func @transform_0(%arg0: i32) -> (i32, i32) {
    %c0_i32 = arith.constant 0 : i32
    %c0_i32_0 = arith.constant 0 : i32
    return %c0_i32, %arg0 : i32, i32
  }
  func.func @transform_1(%arg0: i32) -> (i32, i32) {
    %c0_i32 = arith.constant 0 : i32
    %c0_i32_0 = arith.constant 0 : i32
    %c0_i32_1 = arith.constant 0 : i32
    return %c0_i32, %c0_i32_0 : i32, i32
  }
  func.func @transform_2(%arg0: i32) -> (i32, i32) {
    %c0_i32 = arith.constant 0 : i32
    %c0_i32_0 = arith.constant 0 : i32
    %c0_i32_1 = arith.constant 0 : i32
    return %c0_i32, %c0_i32_0 : i32, i32
  }
  func.func @transform_3(%arg0: i32) -> (i32, i32) {
    %c0_i32 = arith.constant 0 : i32
    %c0_i32_0 = arith.constant 0 : i32
    %c0_i32_1 = arith.constant 0 : i32
    return %c0_i32, %c0_i32_0 : i32, i32
  }
  func.func @transform_4(%arg0: i32) -> (i32, i32) {
    %c0_i32 = arith.constant 0 : i32
    %c0_i32_0 = arith.constant 0 : i32
    %c0_i32_1 = arith.constant 0 : i32
    return %c0_i32, %c0_i32_0 : i32, i32
  }
  func.func @transform_5(%arg0: i32) -> (i32, i32) {
    %c0_i32 = arith.constant 0 : i32
    %c0_i32_0 = arith.constant 0 : i32
    return %c0_i32, %arg0 : i32, i32
  }
}

</mosaic_0001>

<llo_original>
// kernel: actor_critic_forward.1
$region0: #{actor_critic_forward.1}
  #allocation0 [shape = 'u32[]', space=smem, size = 0x4, offset = 0x4, fixed_abs, tag = 'smem constant byte address 0x4 - core index']
  #allocation1 [shape = 'u32[72,128]{1,0:T(1,128)}', space=vmem, size = 0x9000, scoped, tag = 'internal scratch']
  %s0 = inlined_call_operand.vmem [shape: f32[4,8], index: 0, kind: input, shape index: {}]
  %s1 = inlined_call_operand.vmem [shape: f32[64,4], index: 1, kind: input, shape index: {}]
  %s2 = inlined_call_operand.vmem [shape: f32[64,64], index: 2, kind: input, shape index: {}]
  %s3 = inlined_call_operand.vmem [shape: f32[3,64], index: 3, kind: input, shape index: {}]
  %s4 = inlined_call_operand.vmem [shape: f32[64,3], index: 4, kind: input, shape index: {}]
  %s5 = inlined_call_operand.vmem [shape: f32[3,8], index: 5, kind: output, shape index: {}]
  %s6 = sld [smem:[#allocation0]]
  $region30: #{actor_critic_forward.1} parent=0
    _
  %s8 = ssub.s32 1, %s6
  %s9 = scalar_select 0, %s8, %s6
  // Predicated region
  $region2: #{actor_critic_forward.1} parent=0 // pred_check
    _
  $region3: #{actor_critic_forward.1} parent=0 // pred_check_branch
    %11 = sbr.rel (0) target = $region5
  $region4: #{actor_critic_forward.1} parent=0 // pred_region
    _
  $region5: #{actor_critic_forward.1} parent=0 // pred_fallthru
    _
  // Predicated region
  $region6: #{actor_critic_forward.1} parent=0 // pred_check
    _
  $region7: #{actor_critic_forward.1} parent=0 // pred_check_branch
    %13 = sbr.rel (0) target = $region9
  $region8: #{actor_critic_forward.1} parent=0 // pred_region
    _
  $region9: #{actor_critic_forward.1} parent=0 // pred_fallthru
    _
  // Predicated region
  $region10: #{actor_critic_forward.1} parent=0 // pred_check
    _
  $region11: #{actor_critic_forward.1} parent=0 // pred_check_branch
    %15 = sbr.rel (0) target = $region13
  $region12: #{actor_critic_forward.1} parent=0 // pred_region
    _
  $region13: #{actor_critic_forward.1} parent=0 // pred_fallthru
    _
  // Predicated region
  $region14: #{actor_critic_forward.1} parent=0 // pred_check
    _
  $region15: #{actor_critic_forward.1} parent=0 // pred_check_branch
    %17 = sbr.rel (0) target = $region17
  $region16: #{actor_critic_forward.1} parent=0 // pred_region
    _
  $region17: #{actor_critic_forward.1} parent=0 // pred_fallthru
    _
  // Predicated region
  $region18: #{actor_critic_forward.1} parent=0 // pred_check
    _
  $region19: #{actor_critic_forward.1} parent=0 // pred_check_branch
    %19 = sbr.rel (0) target = $region21
  $region20: #{actor_critic_forward.1} parent=0 // pred_region
    _
  $region21: #{actor_critic_forward.1} parent=0 // pred_fallthru
    _
  %v20 = vld [vmem:[%s0] sm:$0xf]
  %v21 = vld [vmem:[%s4] sm:$0xff]
  %v22 = vld [vmem:[%s4 + $0x8] sm:$0xff]
  %v23 = vld [vmem:[%s4 + $0x10] sm:$0xff]
  %v24 = vld [vmem:[%s4 + $0x18] sm:$0xff]
  %v25 = vld [vmem:[%s4 + $0x20] sm:$0xff]
  %v26 = vld [vmem:[%s4 + $0x28] sm:$0xff]
  %v27 = vld [vmem:[%s4 + $0x30] sm:$0xff]
  %v28 = vld [vmem:[%s4 + $0x38] sm:$0xff]
  %v29 = vld [vmem:[%s1] sm:$0xff]
  %v30 = vld [vmem:[%s1 + $0x8] sm:$0xff]
  %v31 = vld [vmem:[%s1 + $0x10] sm:$0xff]
  %v32 = vld [vmem:[%s1 + $0x18] sm:$0xff]
  %v33 = vld [vmem:[%s1 + $0x20] sm:$0xff]
  %v34 = vld [vmem:[%s1 + $0x28] sm:$0xff]
  %v35 = vld [vmem:[%s1 + $0x30] sm:$0xff]
  %v36 = vld [vmem:[%s1 + $0x38] sm:$0xff]
  %38 = vset.pattern.permute.xlu0 0
  %39 = vperm.xlu0 %38, %v21
  %v40 = vpop.permute.xlu0 %39
  %43 = vset.pattern.permute.xlu0 0
  %44 = vperm.xlu0 %43, %v22
  %v45 = vpop.permute.xlu0 %44
  %48 = vset.pattern.permute.xlu0 0
  %49 = vperm.xlu0 %48, %v23
  %v50 = vpop.permute.xlu0 %49
  %53 = vset.pattern.permute.xlu0 0
  %54 = vperm.xlu0 %53, %v24
  %v55 = vpop.permute.xlu0 %54
  %58 = vset.pattern.permute.xlu0 0
  %59 = vperm.xlu0 %58, %v25
  %v60 = vpop.permute.xlu0 %59
  %63 = vset.pattern.permute.xlu0 0
  %64 = vperm.xlu0 %63, %v26
  %v65 = vpop.permute.xlu0 %64
  %68 = vset.pattern.permute.xlu0 0
  %69 = vperm.xlu0 %68, %v27
  %v70 = vpop.permute.xlu0 %69
  %73 = vset.pattern.permute.xlu0 0
  %74 = vperm.xlu0 %73, %v28
  %v75 = vpop.permute.xlu0 %74
  %vm77 = vcmask 31744
  %v79 = vsel %vm77, %v29, 0
  %v82 = vsel %vm77, %v30, 0
  %v85 = vsel %vm77, %v31, 0
  %v88 = vsel %vm77, %v32, 0
  %v91 = vsel %vm77, %v33, 0
  %v94 = vsel %vm77, %v34, 0
  %v97 = vsel %vm77, %v35, 0
  %v100 = vsel %vm77, %v36, 0
  %vm102 = vcmask 1043456
  %v104 = vsel %vm102, %v20, 0
  %106 = vmatpush.msra.mxu0 0.0
  %107 = vmatpush.msra.mxu0 0.0
  %108 = vmatpush.msra.mxu0 0.0
  %109 = vmatpush.msra.mxu0 0.0
  %110 = vmatpush.msra.mxu0 0.0
  %111 = vmatpush.msra.mxu0 0.0
  %112 = vmatpush.msra.mxu0 0.0
  %113 = vmatpush.msra.mxu0 0.0
  %114 = vmatpush.msra.mxu0 0.0
  %115 = vmatpush.msra.mxu0 0.0
  %116 = vmatpush.msra.mxu0 0.0
  %117 = vmatpush.msra.mxu0 0.0
  %118 = vmatpush.msra.mxu0 0.0
  %119 = vmatpush.msra.mxu0 0.0
  %120 = vmatpush.msra.mxu0 0.0
  %121 = vmatpush.msra.mxu0 %v104
  %122 = vmatmul.f32.gmra.mxu0 %v79
  %v123 = vpop.f32.mrf.mxu0
  %v124 = vadd.f32 %v40, %v123
  %125 = vmatmul.f32.gmra.mxu0 %v82
  %v126 = vpop.f32.mrf.mxu0
  %v127 = vadd.f32 %v45, %v126
  %128 = vmatmul.f32.gmra.mxu0 %v85
  %v129 = vpop.f32.mrf.mxu0
  %v130 = vadd.f32 %v50, %v129
  %131 = vmatmul.f32.gmra.mxu0 %v88
  %v132 = vpop.f32.mrf.mxu0
  %v133 = vadd.f32 %v55, %v132
  %134 = vmatmul.f32.gmra.mxu0 %v91
  %v135 = vpop.f32.mrf.mxu0
  %v136 = vadd.f32 %v60, %v135
  %137 = vmatmul.f32.gmra.mxu0 %v94
  %v138 = vpop.f32.mrf.mxu0
  %v139 = vadd.f32 %v65, %v138
  %140 = vmatmul.f32.gmra.mxu0 %v97
  %v141 = vpop.f32.mrf.mxu0
  %v142 = vadd.f32 %v70, %v141
  %143 = vmatmul.f32.gmra.mxu0 %v100
  %v144 = vpop.f32.mrf.mxu0
  %v145 = vadd.f32 %v75, %v144
  %146 = vdwg.mxu0
  %v147 = vtanh.pop %v124
  %v148 = vtanh.pop %v127
  %v149 = vtanh.pop %v130
  %v150 = vtanh.pop %v133
  %v151 = vtanh.pop %v136
  %v152 = vtanh.pop %v139
  %v153 = vtanh.pop %v142
  %v154 = vtanh.pop %v145
  %v155 = vld [vmem:[%s2] sm:$0xff]
  %v156 = vld [vmem:[%s2 + $0x8] sm:$0xff]
  %v157 = vld [vmem:[%s2 + $0x10] sm:$0xff]
  %v158 = vld [vmem:[%s2 + $0x18] sm:$0xff]
  %v159 = vld [vmem:[%s2 + $0x20] sm:$0xff]
  %v160 = vld [vmem:[%s2 + $0x28] sm:$0xff]
  %v161 = vld [vmem:[%s2 + $0x30] sm:$0xff]
  %v162 = vld [vmem:[%s2 + $0x38] sm:$0xff]
  %163 = vset.pattern.permute.xlu0 1
  %164 = vperm.xlu0 %163, %v21
  %v165 = vpop.permute.xlu0 %164
  %167 = vset.pattern.permute.xlu0 1
  %168 = vperm.xlu0 %167, %v22
  %v169 = vpop.permute.xlu0 %168
  %171 = vset.pattern.permute.xlu0 1
  %172 = vperm.xlu0 %171, %v23
  %v173 = vpop.permute.xlu0 %172
  %175 = vset.pattern.permute.xlu0 1
  %176 = vperm.xlu0 %175, %v24
  %v177 = vpop.permute.xlu0 %176
  %179 = vset.pattern.permute.xlu0 1
  %180 = vperm.xlu0 %179, %v25
  %v181 = vpop.permute.xlu0 %180
  %183 = vset.pattern.permute.xlu0 1
  %184 = vperm.xlu0 %183, %v26
  %v185 = vpop.permute.xlu0 %184
  %187 = vset.pattern.permute.xlu0 1
  %188 = vperm.xlu0 %187, %v27
  %v189 = vpop.permute.xlu0 %188
  %191 = vset.pattern.permute.xlu0 1
  %192 = vperm.xlu0 %191, %v28
  %v193 = vpop.permute.xlu0 %192
  %vm195 = vcmask 523264
  %v197 = vsel %vm195, %v155, 0
  %v200 = vsel %vm195, %v156, 0
  %v203 = vsel %vm195, %v157, 0
  %v206 = vsel %vm195, %v158, 0
  %v209 = vsel %vm195, %v159, 0
  %v212 = vsel %vm195, %v160, 0
  %v215 = vsel %vm195, %v161, 0
  %v218 = vsel %vm195, %v162, 0
  %220 = vmatpush.msra.mxu0 0.0
  %221 = vmatpush.msra.mxu0 0.0
  %222 = vmatpush.msra.mxu0 0.0
  %223 = vmatpush.msra.mxu0 0.0
  %224 = vmatpush.msra.mxu0 0.0
  %225 = vmatpush.msra.mxu0 0.0
  %226 = vmatpush.msra.mxu0 0.0
  %227 = vmatpush.msra.mxu0 0.0
  %228 = vmatpush.msra.mxu0 %v154
  %229 = vmatpush.msra.mxu0 %v153
  %230 = vmatpush.msra.mxu0 %v152
  %231 = vmatpush.msra.mxu0 %v151
  %232 = vmatpush.msra.mxu0 %v150
  %233 = vmatpush.msra.mxu0 %v149
  %234 = vmatpush.msra.mxu0 %v148
  %235 = vmatpush.msra.mxu0 %v147
  %236 = vmatmul.f32.gmra.mxu0 %v197
  %v237 = vpop.f32.mrf.mxu0
  %v238 = vadd.f32 %v165, %v237
  %239 = vmatmul.f32.gmra.mxu0 %v200
  %v240 = vpop.f32.mrf.mxu0
  %v241 = vadd.f32 %v169, %v240
  %242 = vmatmul.f32.gmra.mxu0 %v203
  %v243 = vpop.f32.mrf.mxu0
  %v244 = vadd.f32 %v173, %v243
  %245 = vmatmul.f32.gmra.mxu0 %v206
  %v246 = vpop.f32.mrf.mxu0
  %v247 = vadd.f32 %v177, %v246
  %248 = vmatmul.f32.gmra.mxu0 %v209
  %v249 = vpop.f32.mrf.mxu0
  %v250 = vadd.f32 %v181, %v249
  %251 = vmatmul.f32.gmra.mxu0 %v212
  %v252 = vpop.f32.mrf.mxu0
  %v253 = vadd.f32 %v185, %v252
  %254 = vmatmul.f32.gmra.mxu0 %v215
  %v255 = vpop.f32.mrf.mxu0
  %v256 = vadd.f32 %v189, %v255
  %257 = vmatmul.f32.gmra.mxu0 %v218
  %v258 = vpop.f32.mrf.mxu0
  %v259 = vadd.f32 %v193, %v258
  %260 = vdwg.mxu0
  %v261 = vtanh.pop %v238
  %v262 = vtanh.pop %v241
  %v263 = vtanh.pop %v244
  %v264 = vtanh.pop %v247
  %v265 = vtanh.pop %v250
  %v266 = vtanh.pop %v253
  %v267 = vtanh.pop %v256
  %v268 = vtanh.pop %v259
  %v269 = vld [vmem:[%s3] sm:$0x7]
  %270 = vset.pattern.permute.xlu0 2
  %271 = vperm.xlu0 %270, %v21
  %v272 = vpop.permute.xlu0 %271
  %v275 = vsel %vm195, %v269, 0
  %277 = vmatpush.msra.mxu0 0.0
  %278 = vmatpush.msra.mxu0 0.0
  %279 = vmatpush.msra.mxu0 0.0
  %280 = vmatpush.msra.mxu0 0.0
  %281 = vmatpush.msra.mxu0 0.0
  %282 = vmatpush.msra.mxu0 0.0
  %283 = vmatpush.msra.mxu0 0.0
  %284 = vmatpush.msra.mxu0 0.0
  %285 = vmatpush.msra.mxu0 %v268
  %286 = vmatpush.msra.mxu0 %v267
  %287 = vmatpush.msra.mxu0 %v266
  %288 = vmatpush.msra.mxu0 %v265
  %289 = vmatpush.msra.mxu0 %v264
  %290 = vmatpush.msra.mxu0 %v263
  %291 = vmatpush.msra.mxu0 %v262
  %292 = vmatpush.msra.mxu0 %v261
  %293 = vmatmul.f32.gmra.mxu0 %v275
  %v294 = vpop.f32.mrf.mxu0
  %v295 = vadd.f32 %v272, %v294
  %296 = vdwg.mxu0
  %vm297 = vcmask 59392
  %298 = vst.msk [vmem:[%s5] sm:$0x7] %vm297, %v295
  // Predicated region
  $region22: #{actor_critic_forward.1} parent=0 // pred_check
    _
  $region23: #{actor_critic_forward.1} parent=0 // pred_check_branch
    %300 = sbr.rel (0) target = $region25
  $region24: #{actor_critic_forward.1} parent=0 // pred_region
    _
  $region25: #{actor_critic_forward.1} parent=0 // pred_fallthru
    _
  // Predicated region
  $region26: #{actor_critic_forward.1} parent=0 // pred_check
    _
  $region27: #{actor_critic_forward.1} parent=0 // pred_check_branch
    %302 = sbr.rel (0) target = $region29
  $region28: #{actor_critic_forward.1} parent=0 // pred_region
    _
  $region29: #{actor_critic_forward.1} parent=0 // pred_fallthru
    _

</llo_original>
